<compile_context>
chip_gen: v6e
topology: v6e:2x2x1
jax: 0.10.0
libtpu: 0.0.40
codegen_flags: <defaults>
</compile_context>

<pallas_src>
import jax
import jax.numpy as jnp
from jax.experimental import pallas as pl
from jax.experimental.pallas import tpu as pltpu


def _round_up(a, m):
    return (a + m - 1) // m * m


def _qnet_kernel(img_ref, actT_ref, w1i_ref, w1a_ref, b1_ref, alpha_ref,
                 w2_ref, b2_ref, w3_ref, b3_ref, o_ref):
    # Put the batch on the lane axis for the whole kernel: one tile-aligned
    # (tb, F) -> (F, tb) XLU transpose (hidden under the img DMA); every later
    # store is then lane-dense.  Inputs are cast to f32 in-register so the HBM
    # stream may be bf16 while accumulation stays f32.
    x_t = jnp.transpose(img_ref[...].astype(jnp.float32))          # (F, tb)
    a_t = actT_ref[...].astype(jnp.float32)                        # (A, tb)

    # fc1 with torch.cat fused as split-K (img part + tiny action part) + PReLU1.
    h = (jnp.dot(w1i_ref[...], x_t, preferred_element_type=jnp.float32)
         + jnp.dot(w1a_ref[...], a_t, preferred_element_type=jnp.float32)
         + b1_ref[...])                                             # (h1, tb)
    h = jnp.where(h > 0, h, alpha_ref[0] * h)

    # fc2 + PReLU2.
    h = jnp.dot(w2_ref[...], h, preferred_element_type=jnp.float32) + b2_ref[...]  # (h2, tb)
    h = jnp.where(h > 0, h, alpha_ref[1] * h)

    # fc3: contraction over h2 (= feat_dim // 64) on the VPU + sublane reduce
    # -> lane-dense (1, tb) output row (unmasked vst).
    o_ref[...] = jnp.sum(h * w3_ref[...], axis=0, keepdims=True) + b3_ref[0]


def qnetwork_forward(img_feats, action, params, *, tile_b=1024):
    """img_feats: (B, feat_dim), action: (B, action_dim) -> (B, 1) float32.

    img_feats may be f32 or bf16 (cast at the producer, NOT here); the kernel
    accumulates in f32 either way.  feat_dim is expected to be a multiple of 128
    (true for the intended feat_dim since the module uses feat_dim // 64)."""
    w1_img, w1_act, b1, alphas, w2, b2, w3, b3 = params
    B, feat_dim = img_feats.shape
    action_dim = action.shape[1]
    h1 = w1_img.shape[0]
    h2 = w2.shape[0]

    # action is a few % of the img HBM stream; transposing it once here lets the
    # kernel stay fully in the batch-on-lanes orientation.
    act_t = action.T                                                # (A, B)

    # Batch tile: big tiles amortize the ~0.35us/step overhead; cap so large
    # batches get >= 2 grid steps (both v7x TensorCores get work); multiple of
    # 128 keeps the in-kernel transpose and the output row fully tile-aligned.
    tb = min(int(tile_b), _round_up(pl.cdiv(B, 2), 256))
    tb = max(128, _round_up(tb, 128))
    num_tiles = pl.cdiv(B, tb)            # ragged tail handled by Pallas, no pad

    out = pl.pallas_call(
        _qnet_kernel,
        out_shape=jax.ShapeDtypeStruct((num_tiles, tb), jnp.float32),
        grid=(num_tiles,),
        in_specs=[
            pl.BlockSpec((tb, feat_dim), lambda i: (i, 0)),         # img tile
            pl.BlockSpec((action_dim, tb), lambda i: (0, i)),       # action^T tile
            pl.BlockSpec((h1, feat_dim), lambda i: (0, 0)),         # fc1 W (img cols)
            pl.BlockSpec((h1, action_dim), lambda i: (0, 0)),       # fc1 W (act cols)
            pl.BlockSpec((h1, 1), lambda i: (0, 0)),                # fc1 b (column)
            pl.BlockSpec(memory_space=pltpu.MemorySpace.SMEM),      # PReLU alphas
            pl.BlockSpec((h2, h1), lambda i: (0, 0)),               # fc2 W
            pl.BlockSpec((h2, 1), lambda i: (0, 0)),                # fc2 b (column)
            pl.BlockSpec((h2, 1), lambda i: (0, 0)),                # fc3 W (column)
            pl.BlockSpec(memory_space=pltpu.MemorySpace.SMEM),      # fc3 b (scalar)
        ],
        out_specs=pl.BlockSpec((1, tb), lambda i: (i, 0)),          # lane-dense row
        compiler_params=pltpu.CompilerParams(
            dimension_semantics=("parallel",)),                     # v7x: 2 TCs
    )(img_feats, act_t, w1_img, w1_act, b1, alphas, w2, b2, w3, b3)

    # Rows of (num_tiles, tb) are the batch in order; tail garbage is sliced off.
    return out.reshape(-1)[:B].reshape(B, 1)


def init_qnetwork_params(key, feat_dim, action_dim):
    """Matches the PyTorch init: Linear weights xavier_uniform (gain=1), biases 0,
    PReLU alpha 0.25.  Weights are kept in torch's (out_features, in_features)
    orientation (exactly what the transposed-orientation kernel wants); fc1's
    weight is one xavier matrix over the concatenated input split into img /
    action column blocks; fc3's weight is stored as an (h2, 1) column."""
    def xavier(k, fan_out, fan_in):
        bound = (6.0 / (fan_in + fan_out)) ** 0.5
        return jax.random.uniform(k, (fan_out, fan_in), jnp.float32, -bound, bound)

    d_in = feat_dim + action_dim
    h1 = feat_dim // 8
    h2 = feat_dim // 64

    k1, k2, k3 = jax.random.split(key, 3)
    w1 = xavier(k1, h1, d_in)                         # (h1, feat_dim + action_dim)
    w1_img, w1_act = w1[:, :feat_dim], w1[:, feat_dim:]
    b1 = jnp.zeros((h1, 1), jnp.float32)
    alphas = jnp.full((2,), 0.25, jnp.float32)        # PReLU default init
    w2 = xavier(k2, h2, h1)                           # (h2, h1)
    b2 = jnp.zeros((h2, 1), jnp.float32)
    w3 = xavier(k3, 1, h2).T                          # stored as (h2, 1) column
    b3 = jnp.zeros((1,), jnp.float32)
    return (w1_img, w1_act, b1, alphas, w2, b2, w3, b3)


def _reference_forward(img_feats, action, params):
    """Pure-JAX reference mirroring the torch module semantics."""
    w1_img, w1_act, b1, alphas, w2, b2, w3, b3 = params
    x = jnp.concatenate([img_feats, action], axis=-1).astype(jnp.float32)
    w1 = jnp.concatenate([w1_img, w1_act], axis=1)    # (h1, d_in)
    h = x @ w1.T + b1.T
    h = jnp.where(h > 0, h, alphas[0] * h)
    h = h @ w2.T + b2.T
    h = jnp.where(h > 0, h, alphas[1] * h)
    return h @ w3 + b3[0]


if __name__ == "__main__":
    feat_dim = 256        # module uses feat_dim // 8 and feat_dim // 64
    action_dim = 8
    batch = 2

    key = jax.random.PRNGKey(0)
    k_img, k_act, k_par = jax.random.split(key, 3)

    img_feats = jax.random.normal(k_img, (batch, feat_dim), jnp.float32)
    action = jax.random.normal(k_act, (batch, action_dim), jnp.float32)
    params = init_qnetwork_params(k_par, feat_dim, action_dim)

    # small-batch f32 run (single partial tile)
    out = jax.block_until_ready(qnetwork_forward(img_feats, action, params))
    ref = _reference_forward(img_feats, action, params)
    assert out.shape == (batch, 1)
    assert jnp.allclose(out, ref, atol=1e-4, rtol=1e-4), (out, ref)

    # multi-tile grid with a ragged tail (no wrapper-side padding pass)
    big_b = 1040
    kb1, kb2 = jax.random.split(jax.random.PRNGKey(1))
    img_b = jax.random.normal(kb1, (big_b, feat_dim), jnp.float32)
    act_b = jax.random.normal(kb2, (big_b, action_dim), jnp.float32)

    out_b = jax.block_until_ready(qnetwork_forward(img_b, act_b, params))
    ref_b = _reference_forward(img_b, act_b, params)
    assert out_b.shape == (big_b, 1)
    assert jnp.allclose(out_b, ref_b, atol=1e-4, rtol=1e-4)

    # bf16-at-source img stream (e.g. a bf16 feature extractor); f32 accumulate.
    out_bf16 = jax.block_until_ready(
        qnetwork_forward(img_b.astype(jnp.bfloat16), act_b, params))
    assert jnp.allclose(out_bf16, ref_b, atol=1e-1, rtol=1e-1)

    print("KERNEL_OK")
</pallas_src>

<mosaic_0001>
module attributes {stable_mosaic.version = 11 : i64} {
  func.func @_qnet_kernel(%arg0: i32, %arg1: memref<256x256xf32, #tpu.memory_space<vmem>>, %arg2: memref<8x256xf32, #tpu.memory_space<vmem>>, %arg3: memref<32x256xf32, #tpu.memory_space<vmem>>, %arg4: memref<32x8xf32, #tpu.memory_space<vmem>>, %arg5: memref<32x1xf32, #tpu.memory_space<vmem>>, %arg6: memref<2xf32, #tpu.memory_space<smem>>, %arg7: memref<4x32xf32, #tpu.memory_space<vmem>>, %arg8: memref<4x1xf32, #tpu.memory_space<vmem>>, %arg9: memref<4x1xf32, #tpu.memory_space<vmem>>, %arg10: memref<1xf32, #tpu.memory_space<smem>>, %arg11: memref<1x256xf32, #tpu.memory_space<vmem>>) attributes {dimension_semantics = [#tpu.dimension_semantics<parallel>], iteration_bounds = array<i64: 1>, scalar_prefetch = 0 : i64, scratch_operands = 0 : i64, tpu.core_type = #tpu.core_type<tc>, window_params = [{transform_indices = @transform_0, window_bounds = array<i64: 256, 256>}, {transform_indices = @transform_1, window_bounds = array<i64: 8, 256>}, {pipeline_mode = #tpu.pipeline_mode<synchronous>, transform_indices = @transform_2, window_bounds = array<i64: 32, 256>}, {pipeline_mode = #tpu.pipeline_mode<synchronous>, transform_indices = @transform_3, window_bounds = array<i64: 32, 8>}, {pipeline_mode = #tpu.pipeline_mode<synchronous>, transform_indices = @transform_4, window_bounds = array<i64: 32, 1>}, {transform_indices = @transform_5, window_bounds = array<i64: 2>}, {pipeline_mode = #tpu.pipeline_mode<synchronous>, transform_indices = @transform_6, window_bounds = array<i64: 4, 32>}, {pipeline_mode = #tpu.pipeline_mode<synchronous>, transform_indices = @transform_7, window_bounds = array<i64: 4, 1>}, {pipeline_mode = #tpu.pipeline_mode<synchronous>, transform_indices = @transform_8, window_bounds = array<i64: 4, 1>}, {transform_indices = @transform_9, window_bounds = array<i64: 1>}, {transform_indices = @transform_10, window_bounds = array<i64: 1, 256>}]} {
    %c0 = arith.constant 0 : index
    %c0_0 = arith.constant 0 : index
    %0 = vector.load %arg1[%c0, %c0_0] : memref<256x256xf32, #tpu.memory_space<vmem>>, vector<256x256xf32>
    %1 = tpu.transpose %0, [1, 0] : vector<256x256xf32> -> vector<256x256xf32>
    %c0_1 = arith.constant 0 : index
    %c0_2 = arith.constant 0 : index
    %2 = vector.load %arg2[%c0_1, %c0_2] : memref<8x256xf32, #tpu.memory_space<vmem>>, vector<8x256xf32>
    %c0_3 = arith.constant 0 : index
    %c0_4 = arith.constant 0 : index
    %3 = vector.load %arg3[%c0_3, %c0_4] : memref<32x256xf32, #tpu.memory_space<vmem>>, vector<32x256xf32>
    %cst = arith.constant dense<0.000000e+00> : vector<32x256xf32>
    %4 = tpu.matmul %3, %1, %cst {dimension_numbers = #tpu.dot_dimension_numbers<[1], [0], [0], [1], [0, 0, 1, 1], [], []>} : vector<32x256xf32>, vector<256x256xf32>, vector<32x256xf32> -> vector<32x256xf32>
    %c0_5 = arith.constant 0 : index
    %c0_6 = arith.constant 0 : index
    %5 = vector.load %arg4[%c0_5, %c0_6] : memref<32x8xf32, #tpu.memory_space<vmem>>, vector<32x8xf32>
    %cst_7 = arith.constant dense<0.000000e+00> : vector<32x256xf32>
    %6 = tpu.matmul %5, %2, %cst_7 {dimension_numbers = #tpu.dot_dimension_numbers<[1], [0], [0], [1], [0, 0, 1, 1], [], []>} : vector<32x8xf32>, vector<8x256xf32>, vector<32x256xf32> -> vector<32x256xf32>
    %7 = arith.addf %4, %6 : vector<32x256xf32>
    %c0_8 = arith.constant 0 : index
    %c0_9 = arith.constant 0 : index
    %8 = vector.load %arg5[%c0_8, %c0_9] : memref<32x1xf32, #tpu.memory_space<vmem>>, vector<32x1xf32>
    %9 = vector.broadcast %8 : vector<32x1xf32> to vector<32x256xf32>
    %10 = arith.addf %7, %9 : vector<32x256xf32>
    %cst_10 = arith.constant 0.000000e+00 : f32
    %11 = vector.broadcast %cst_10 : f32 to vector<32x256xf32>
    %12 = arith.cmpf ogt, %10, %11 : vector<32x256xf32>
    %c0_11 = arith.constant 0 : index
    %13 = memref.load %arg6[%c0_11] : memref<2xf32, #tpu.memory_space<smem>>
    %14 = vector.broadcast %13 : f32 to vector<32x256xf32>
    %15 = arith.mulf %14, %10 : vector<32x256xf32>
    %16 = arith.select %12, %10, %15 : vector<32x256xi1>, vector<32x256xf32>
    %c0_12 = arith.constant 0 : index
    %c0_13 = arith.constant 0 : index
    %17 = vector.load %arg7[%c0_12, %c0_13] : memref<4x32xf32, #tpu.memory_space<vmem>>, vector<4x32xf32>
    %cst_14 = arith.constant dense<0.000000e+00> : vector<4x256xf32>
    %18 = tpu.matmul %17, %16, %cst_14 {dimension_numbers = #tpu.dot_dimension_numbers<[1], [0], [0], [1], [0, 0, 1, 1], [], []>} : vector<4x32xf32>, vector<32x256xf32>, vector<4x256xf32> -> vector<4x256xf32>
    %c0_15 = arith.constant 0 : index
    %c0_16 = arith.constant 0 : index
    %19 = vector.load %arg8[%c0_15, %c0_16] : memref<4x1xf32, #tpu.memory_space<vmem>>, vector<4x1xf32>
    %20 = vector.broadcast %19 : vector<4x1xf32> to vector<4x256xf32>
    %21 = arith.addf %18, %20 : vector<4x256xf32>
    %cst_17 = arith.constant 0.000000e+00 : f32
    %22 = vector.broadcast %cst_17 : f32 to vector<4x256xf32>
    %23 = arith.cmpf ogt, %21, %22 : vector<4x256xf32>
    %c1 = arith.constant 1 : index
    %24 = memref.load %arg6[%c1] : memref<2xf32, #tpu.memory_space<smem>>
    %25 = vector.broadcast %24 : f32 to vector<4x256xf32>
    %26 = arith.mulf %25, %21 : vector<4x256xf32>
    %27 = arith.select %23, %21, %26 : vector<4x256xi1>, vector<4x256xf32>
    %c0_18 = arith.constant 0 : index
    %c0_19 = arith.constant 0 : index
    %28 = vector.load %arg9[%c0_18, %c0_19] : memref<4x1xf32, #tpu.memory_space<vmem>>, vector<4x1xf32>
    %29 = vector.broadcast %28 : vector<4x1xf32> to vector<4x256xf32>
    %30 = arith.mulf %27, %29 : vector<4x256xf32>
    %cst_20 = arith.constant dense<0.000000e+00> : vector<256xf32>
    %31 = vector.multi_reduction <add>, %30, %cst_20 [0] : vector<4x256xf32> to vector<256xf32>
    %32 = vector.shape_cast %31 : vector<256xf32> to vector<1x256xf32>
    %c0_21 = arith.constant 0 : index
    %33 = memref.load %arg10[%c0_21] : memref<1xf32, #tpu.memory_space<smem>>
    %34 = vector.broadcast %33 : f32 to vector<1x256xf32>
    %35 = arith.addf %32, %34 : vector<1x256xf32>
    %c0_22 = arith.constant 0 : index
    %c0_23 = arith.constant 0 : index
    %36 = vector.load %arg11[%c0_22, %c0_23] : memref<1x256xf32, #tpu.memory_space<vmem>>, vector<1x256xf32>
    tpu.vector_store %arg11[%c0_22, %c0_23], %35 {strides = array<i32>} : memref<1x256xf32, #tpu.memory_space<vmem>>, vector<1x256xf32>,
    return
  }
  func.func @transform_0(%arg0: i32) -> (i32, i32) {
    %c0_i32 = arith.constant 0 : i32
    %c0_i32_0 = arith.constant 0 : i32
    return %arg0, %c0_i32 : i32, i32
  }
  func.func @transform_1(%arg0: i32) -> (i32, i32) {
    %c0_i32 = arith.constant 0 : i32
    %c0_i32_0 = arith.constant 0 : i32
    return %c0_i32, %arg0 : i32, i32
  }
  func.func @transform_2(%arg0: i32) -> (i32, i32) {
    %c0_i32 = arith.constant 0 : i32
    %c0_i32_0 = arith.constant 0 : i32
    %c0_i32_1 = arith.constant 0 : i32
    return %c0_i32, %c0_i32_0 : i32, i32
  }
  func.func @transform_3(%arg0: i32) -> (i32, i32) {
    %c0_i32 = arith.constant 0 : i32
    %c0_i32_0 = arith.constant 0 : i32
    %c0_i32_1 = arith.constant 0 : i32
    return %c0_i32, %c0_i32_0 : i32, i32
  }
  func.func @transform_4(%arg0: i32) -> (i32, i32) {
    %c0_i32 = arith.constant 0 : i32
    %c0_i32_0 = arith.constant 0 : i32
    %c0_i32_1 = arith.constant 0 : i32
    return %c0_i32, %c0_i32_0 : i32, i32
  }
  func.func @transform_5(%arg0: i32) -> i32 {
    %c0_i32 = arith.constant 0 : i32
    %c0_i32_0 = arith.constant 0 : i32
    return %c0_i32 : i32
  }
  func.func @transform_6(%arg0: i32) -> (i32, i32) {
    %c0_i32 = arith.constant 0 : i32
    %c0_i32_0 = arith.constant 0 : i32
    %c0_i32_1 = arith.constant 0 : i32
    return %c0_i32, %c0_i32_0 : i32, i32
  }
  func.func @transform_7(%arg0: i32) -> (i32, i32) {
    %c0_i32 = arith.constant 0 : i32
    %c0_i32_0 = arith.constant 0 : i32
    %c0_i32_1 = arith.constant 0 : i32
    return %c0_i32, %c0_i32_0 : i32, i32
  }
  func.func @transform_8(%arg0: i32) -> (i32, i32) {
    %c0_i32 = arith.constant 0 : i32
    %c0_i32_0 = arith.constant 0 : i32
    %c0_i32_1 = arith.constant 0 : i32
    return %c0_i32, %c0_i32_0 : i32, i32
  }
  func.func @transform_9(%arg0: i32) -> i32 {
    %c0_i32 = arith.constant 0 : i32
    %c0_i32_0 = arith.constant 0 : i32
    return %c0_i32 : i32
  }
  func.func @transform_10(%arg0: i32) -> (i32, i32) {
    %c0_i32 = arith.constant 0 : i32
    %c0_i32_0 = arith.constant 0 : i32
    return %arg0, %c0_i32 : i32, i32
  }
}

</mosaic_0001>

<llo_original>
// kernel: tpu_custom_call.1
$region0: #{tpu_custom_call.1}
  #allocation0 [shape = 'u32[]', space=smem, size = 0x4, offset = 0x4, fixed_abs, tag = 'smem constant byte address 0x4 - core index']
  #allocation1 [shape = 'u32[144,128]{1,0:T(1,128)}', space=vmem, size = 0x12000, scoped, tag = 'internal scratch']
  #allocation2 [shape = 'f32[1]{0:T(128)S(6)}', space=smem, size = 0x200, scoped, tag = 'scoped memory for tpu_custom_call.1']
  %s0 = inlined_call_operand.vmem [shape: f32[2,256], index: 0, kind: input, shape index: {}]
  %s1 = inlined_call_operand.vmem [shape: f32[8,2], index: 1, kind: input, shape index: {}]
  %s2 = inlined_call_operand.vmem [shape: f32[32,256], index: 2, kind: input, shape index: {}]
  %s3 = inlined_call_operand.vmem [shape: f32[32,8], index: 3, kind: input, shape index: {}]
  %s4 = inlined_call_operand.vmem [shape: f32[32,1], index: 4, kind: input, shape index: {}]
  %s5 = inlined_call_operand.vmem [shape: f32[2], index: 5, kind: input, shape index: {}]
  %s6 = inlined_call_operand.vmem [shape: f32[4,32], index: 6, kind: input, shape index: {}]
  %s7 = inlined_call_operand.vmem [shape: f32[4,1], index: 7, kind: input, shape index: {}]
  %s8 = inlined_call_operand.vmem [shape: f32[4,1], index: 8, kind: input, shape index: {}]
  %s9 = inlined_call_operand.<no memory space> [shape: f32[1], index: 9, kind: input, shape index: {}]
  %s10 = inlined_call_operand.hbm [shape: f32[1,256], index: 10, kind: output, shape index: {}]
  %s11 = sld [smem:[#allocation0]]
  $region54: #{tpu_custom_call.1} parent=0
    _
  %s13 = ssub.s32 1, %s11
  %s14 = scalar_select 0, %s13, %s11
  %15 = sst [smem:[#allocation2]] %s9
  $region1: #{tpu_custom_call.1} parent=0
    #allocation3 [shape = 'u8[512]{0}', space=smem, size = 0x200, scoped, tag = 'input window, operand 5, single buffered']
    #allocation4 [shape = 's32[1]{0}', space=sflag, size = 0x4, scoped, tag = 'scoped memory for tpu_custom_call.1']
    #allocation5 [shape = 's32[1]{0}', space=sflag, size = 0x4, scoped, tag = 'scoped memory for tpu_custom_call.1']
    #allocation6 [shape = 'u8[1024]{0}', space=vmem, size = 0x400, scoped, tag = 'output window, operand 0, single buffered']
    %16 = vsyncpa [#allocation5], 0
    %17 = vsyncpa [#allocation4], 0
    // Predicated region
    $region2: #{tpu_custom_call.1} parent=1 // pred_check
      _
    $region3: #{tpu_custom_call.1} parent=1 // pred_check_branch
      %19 = sbr.rel (0) target = $region5
    $region4: #{tpu_custom_call.1} parent=1 // pred_region
      _
    $region5: #{tpu_custom_call.1} parent=1 // pred_fallthru
      _
    // Predicated region
    $region6: #{tpu_custom_call.1} parent=1 // pred_check
      _
    $region7: #{tpu_custom_call.1} parent=1 // pred_check_branch
      %21 = sbr.rel (0) target = $region9
    $region8: #{tpu_custom_call.1} parent=1 // pred_region
      _
    $region9: #{tpu_custom_call.1} parent=1 // pred_fallthru
      _
    // Predicated region
    $region10: #{tpu_custom_call.1} parent=1 // pred_check
      _
    $region11: #{tpu_custom_call.1} parent=1 // pred_check_branch
      %23 = sbr.rel (0) target = $region13
    $region12: #{tpu_custom_call.1} parent=1 // pred_region
      _
    $region13: #{tpu_custom_call.1} parent=1 // pred_fallthru
      _
    // Predicated region
    $region14: #{tpu_custom_call.1} parent=1 // pred_check
      _
    $region15: #{tpu_custom_call.1} parent=1 // pred_check_branch
      %25 = sbr.rel (0) target = $region17
    $region16: #{tpu_custom_call.1} parent=1 // pred_region
      _
    $region17: #{tpu_custom_call.1} parent=1 // pred_fallthru
      _
    // Predicated region
    $region18: #{tpu_custom_call.1} parent=1 // pred_check
      _
    $region19: #{tpu_custom_call.1} parent=1 // pred_check_branch
      %27 = sbr.rel (0) target = $region21
    $region20: #{tpu_custom_call.1} parent=1 // pred_region
      _
    $region21: #{tpu_custom_call.1} parent=1 // pred_fallthru
      _
    // Predicated region
    $region22: #{tpu_custom_call.1} parent=1 // pred_check
      _
    $region23: #{tpu_custom_call.1} parent=1 // pred_check_branch
      %29 = sbr.rel (0) target = $region25
    $region24: #{tpu_custom_call.1} parent=1 // pred_region
      %s31 = ssub.s32 16, 16
      %32 = vsyncadd [#allocation5], %s31
      %s34 = sshll.u32 %s5, 4
      %s35 = int_to_ptr.vmem [resolvable:$true] %s34
      %37 = dma.vmem_to_smem %s35, 16, [#allocation3], [#allocation5]
    $region25: #{tpu_custom_call.1} parent=1 // pred_fallthru
      _
    // Predicated region
    $region26: #{tpu_custom_call.1} parent=1 // pred_check
      _
    $region27: #{tpu_custom_call.1} parent=1 // pred_check_branch
      %39 = sbr.rel (0) target = $region29
    $region28: #{tpu_custom_call.1} parent=1 // pred_region
      _
    $region29: #{tpu_custom_call.1} parent=1 // pred_fallthru
      _
    // Predicated region
    $region30: #{tpu_custom_call.1} parent=1 // pred_check
      _
    $region31: #{tpu_custom_call.1} parent=1 // pred_check_branch
      %41 = sbr.rel (0) target = $region33
    $region32: #{tpu_custom_call.1} parent=1 // pred_region
      _
    $region33: #{tpu_custom_call.1} parent=1 // pred_fallthru
      _
    // Predicated region
    $region34: #{tpu_custom_call.1} parent=1 // pred_check
      _
    $region35: #{tpu_custom_call.1} parent=1 // pred_check_branch
      %43 = sbr.rel (0) target = $region37
    $region36: #{tpu_custom_call.1} parent=1 // pred_region
      _
    $region37: #{tpu_custom_call.1} parent=1 // pred_fallthru
      _
    // Predicated region
    $region38: #{tpu_custom_call.1} parent=1 // pred_check
      _
    $region39: #{tpu_custom_call.1} parent=1 // pred_check_branch
      %45 = sbr.rel (0) target = $region41
    $region40: #{tpu_custom_call.1} parent=1 // pred_region
      _
    $region41: #{tpu_custom_call.1} parent=1 // pred_fallthru
      _
    // Predicated region
    $region42: #{tpu_custom_call.1} parent=1 // pred_check
      _
    $region43: #{tpu_custom_call.1} parent=1 // pred_check_branch
      %47 = sbr.rel (0) target = $region45
    $region44: #{tpu_custom_call.1} parent=1 // pred_region
      %48 = dma.done [#allocation5], 16
    $region45: #{tpu_custom_call.1} parent=1 // pred_fallthru
      _
    %49 = sfence
    %v50 = vld [vmem:[%s0] sm:$0xf]
    %v51 = vld [vmem:[%s0 + $0x4] sm:$0xf]
    %v52 = vld [vmem:[%s0 + $0x8] sm:$0xf]
    %v53 = vld [vmem:[%s0 + $0xc] sm:$0xf]
    %v54 = vld [vmem:[%s0 + $0x10] sm:$0xf]
    %v55 = vld [vmem:[%s0 + $0x14] sm:$0xf]
    %v56 = vld [vmem:[%s0 + $0x18] sm:$0xf]
    %v57 = vld [vmem:[%s0 + $0x1c] sm:$0xf]
    %v58 = vld [vmem:[%s0 + $0x20] sm:$0xf]
    %v59 = vld [vmem:[%s0 + $0x24] sm:$0xf]
    %v60 = vld [vmem:[%s0 + $0x28] sm:$0xf]
    %v61 = vld [vmem:[%s0 + $0x2c] sm:$0xf]
    %v62 = vld [vmem:[%s0 + $0x30] sm:$0xf]
    %v63 = vld [vmem:[%s0 + $0x34] sm:$0xf]
    %v64 = vld [vmem:[%s0 + $0x38] sm:$0xf]
    %v65 = vld [vmem:[%s0 + $0x3c] sm:$0xf]
    %v66 = vld [vmem:[%s0 + $0x40] sm:$0xf]
    %v67 = vld [vmem:[%s0 + $0x44] sm:$0xf]
    %v68 = vld [vmem:[%s0 + $0x48] sm:$0xf]
    %v69 = vld [vmem:[%s0 + $0x4c] sm:$0xf]
    %v70 = vld [vmem:[%s0 + $0x50] sm:$0xf]
    %v71 = vld [vmem:[%s0 + $0x54] sm:$0xf]
    %v72 = vld [vmem:[%s0 + $0x58] sm:$0xf]
    %v73 = vld [vmem:[%s0 + $0x5c] sm:$0xf]
    %v74 = vld [vmem:[%s0 + $0x60] sm:$0xf]
    %v75 = vld [vmem:[%s0 + $0x64] sm:$0xf]
    %v76 = vld [vmem:[%s0 + $0x68] sm:$0xf]
    %v77 = vld [vmem:[%s0 + $0x6c] sm:$0xf]
    %v78 = vld [vmem:[%s0 + $0x70] sm:$0xf]
    %v79 = vld [vmem:[%s0 + $0x74] sm:$0xf]
    %v80 = vld [vmem:[%s0 + $0x78] sm:$0xf]
    %v81 = vld [vmem:[%s0 + $0x7c] sm:$0xf]
    %v82 = vld [vmem:[%s0 + $0x80] sm:$0xf]
    %v83 = vld [vmem:[%s0 + $0x84] sm:$0xf]
    %v84 = vld [vmem:[%s0 + $0x88] sm:$0xf]
    %v85 = vld [vmem:[%s0 + $0x8c] sm:$0xf]
    %v86 = vld [vmem:[%s0 + $0x90] sm:$0xf]
    %v87 = vld [vmem:[%s0 + $0x94] sm:$0xf]
    %v88 = vld [vmem:[%s0 + $0x98] sm:$0xf]
    %v89 = vld [vmem:[%s0 + $0x9c] sm:$0xf]
    %v90 = vld [vmem:[%s0 + $0xa0] sm:$0xf]
    %v91 = vld [vmem:[%s0 + $0xa4] sm:$0xf]
    %v92 = vld [vmem:[%s0 + $0xa8] sm:$0xf]
    %v93 = vld [vmem:[%s0 + $0xac] sm:$0xf]
    %v94 = vld [vmem:[%s0 + $0xb0] sm:$0xf]
    %v95 = vld [vmem:[%s0 + $0xb4] sm:$0xf]
    %v96 = vld [vmem:[%s0 + $0xb8] sm:$0xf]
    %v97 = vld [vmem:[%s0 + $0xbc] sm:$0xf]
    %v98 = vld [vmem:[%s0 + $0xc0] sm:$0xf]
    %v99 = vld [vmem:[%s0 + $0xc4] sm:$0xf]
    %v100 = vld [vmem:[%s0 + $0xc8] sm:$0xf]
    %v101 = vld [vmem:[%s0 + $0xcc] sm:$0xf]
    %v102 = vld [vmem:[%s0 + $0xd0] sm:$0xf]
    %v103 = vld [vmem:[%s0 + $0xd4] sm:$0xf]
    %v104 = vld [vmem:[%s0 + $0xd8] sm:$0xf]
    %v105 = vld [vmem:[%s0 + $0xdc] sm:$0xf]
    %v106 = vld [vmem:[%s0 + $0xe0] sm:$0xf]
    %v107 = vld [vmem:[%s0 + $0xe4] sm:$0xf]
    %v108 = vld [vmem:[%s0 + $0xe8] sm:$0xf]
    %v109 = vld [vmem:[%s0 + $0xec] sm:$0xf]
    %v110 = vld [vmem:[%s0 + $0xf0] sm:$0xf]
    %v111 = vld [vmem:[%s0 + $0xf4] sm:$0xf]
    %v112 = vld [vmem:[%s0 + $0xf8] sm:$0xf]
    %v113 = vld [vmem:[%s0 + $0xfc] sm:$0xf]
    %v114 = vld [vmem:[%s0 + $0x100] sm:$0xf]
    %v115 = vld [vmem:[%s0 + $0x104] sm:$0xf]
    %v116 = vld [vmem:[%s0 + $0x108] sm:$0xf]
    %v117 = vld [vmem:[%s0 + $0x10c] sm:$0xf]
    %v118 = vld [vmem:[%s0 + $0x110] sm:$0xf]
    %v119 = vld [vmem:[%s0 + $0x114] sm:$0xf]
    %v120 = vld [vmem:[%s0 + $0x118] sm:$0xf]
    %v121 = vld [vmem:[%s0 + $0x11c] sm:$0xf]
    %v122 = vld [vmem:[%s0 + $0x120] sm:$0xf]
    %v123 = vld [vmem:[%s0 + $0x124] sm:$0xf]
    %v124 = vld [vmem:[%s0 + $0x128] sm:$0xf]
    %v125 = vld [vmem:[%s0 + $0x12c] sm:$0xf]
    %v126 = vld [vmem:[%s0 + $0x130] sm:$0xf]
    %v127 = vld [vmem:[%s0 + $0x134] sm:$0xf]
    %v128 = vld [vmem:[%s0 + $0x138] sm:$0xf]
    %v129 = vld [vmem:[%s0 + $0x13c] sm:$0xf]
    %v130 = vld [vmem:[%s0 + $0x140] sm:$0xf]
    %v131 = vld [vmem:[%s0 + $0x144] sm:$0xf]
    %v132 = vld [vmem:[%s0 + $0x148] sm:$0xf]
    %v133 = vld [vmem:[%s0 + $0x14c] sm:$0xf]
    %v134 = vld [vmem:[%s0 + $0x150] sm:$0xf]
    %v135 = vld [vmem:[%s0 + $0x154] sm:$0xf]
    %v136 = vld [vmem:[%s0 + $0x158] sm:$0xf]
    %v137 = vld [vmem:[%s0 + $0x15c] sm:$0xf]
    %v138 = vld [vmem:[%s0 + $0x160] sm:$0xf]
    %v139 = vld [vmem:[%s0 + $0x164] sm:$0xf]
    %v140 = vld [vmem:[%s0 + $0x168] sm:$0xf]
    %v141 = vld [vmem:[%s0 + $0x16c] sm:$0xf]
    %v142 = vld [vmem:[%s0 + $0x170] sm:$0xf]
    %v143 = vld [vmem:[%s0 + $0x174] sm:$0xf]
    %v144 = vld [vmem:[%s0 + $0x178] sm:$0xf]
    %v145 = vld [vmem:[%s0 + $0x17c] sm:$0xf]
    %v146 = vld [vmem:[%s0 + $0x180] sm:$0xf]
    %v147 = vld [vmem:[%s0 + $0x184] sm:$0xf]
    %v148 = vld [vmem:[%s0 + $0x188] sm:$0xf]
    %v149 = vld [vmem:[%s0 + $0x18c] sm:$0xf]
    %v150 = vld [vmem:[%s0 + $0x190] sm:$0xf]
    %v151 = vld [vmem:[%s0 + $0x194] sm:$0xf]
    %v152 = vld [vmem:[%s0 + $0x198] sm:$0xf]
    %v153 = vld [vmem:[%s0 + $0x19c] sm:$0xf]
    %v154 = vld [vmem:[%s0 + $0x1a0] sm:$0xf]
    %v155 = vld [vmem:[%s0 + $0x1a4] sm:$0xf]
    %v156 = vld [vmem:[%s0 + $0x1a8] sm:$0xf]
    %v157 = vld [vmem:[%s0 + $0x1ac] sm:$0xf]
    %v158 = vld [vmem:[%s0 + $0x1b0] sm:$0xf]
    %v159 = vld [vmem:[%s0 + $0x1b4] sm:$0xf]
    %v160 = vld [vmem:[%s0 + $0x1b8] sm:$0xf]
    %v161 = vld [vmem:[%s0 + $0x1bc] sm:$0xf]
    %v162 = vld [vmem:[%s0 + $0x1c0] sm:$0xf]
    %v163 = vld [vmem:[%s0 + $0x1c4] sm:$0xf]
    %v164 = vld [vmem:[%s0 + $0x1c8] sm:$0xf]
    %v165 = vld [vmem:[%s0 + $0x1cc] sm:$0xf]
    %v166 = vld [vmem:[%s0 + $0x1d0] sm:$0xf]
    %v167 = vld [vmem:[%s0 + $0x1d4] sm:$0xf]
    %v168 = vld [vmem:[%s0 + $0x1d8] sm:$0xf]
    %v169 = vld [vmem:[%s0 + $0x1dc] sm:$0xf]
    %v170 = vld [vmem:[%s0 + $0x1e0] sm:$0xf]
    %v171 = vld [vmem:[%s0 + $0x1e4] sm:$0xf]
    %v172 = vld [vmem:[%s0 + $0x1e8] sm:$0xf]
    %v173 = vld [vmem:[%s0 + $0x1ec] sm:$0xf]
    %v174 = vld [vmem:[%s0 + $0x1f0] sm:$0xf]
    %v175 = vld [vmem:[%s0 + $0x1f4] sm:$0xf]
    %v176 = vld [vmem:[%s0 + $0x1f8] sm:$0xf]
    %v177 = vld [vmem:[%s0 + $0x1fc] sm:$0xf]
    %v178 = vld [vmem:[%s1] sm:$0xff]
    %v179 = vld [vmem:[%s1 + $0x8] sm:$0xff]
    %v180 = vld [vmem:[%s2] sm:$0xff]
    %v181 = vld [vmem:[%s2 + $0x8] sm:$0xff]
    %v182 = vld [vmem:[%s2 + $0x10] sm:$0xff]
    %v183 = vld [vmem:[%s2 + $0x18] sm:$0xff]
    %v184 = vld [vmem:[%s2 + $0x20] sm:$0xff]
    %v185 = vld [vmem:[%s2 + $0x28] sm:$0xff]
    %v186 = vld [vmem:[%s2 + $0x30] sm:$0xff]
    %v187 = vld [vmem:[%s2 + $0x38] sm:$0xff]
    %v188 = vld [vmem:[%s3] sm:$0xff]
    %v189 = vld [vmem:[%s3 + $0x8] sm:$0xff]
    %v190 = vld [vmem:[%s3 + $0x10] sm:$0xff]
    %v191 = vld [vmem:[%s3 + $0x18] sm:$0xff]
    %vm192 = vcmask 64512
    %v194 = vsel %vm192, %v188, 0
    %v197 = vsel %vm192, %v189, 0
    %v200 = vsel %vm192, %v190, 0
    %v203 = vsel %vm192, %v191, 0
    %205 = vmatprep.subr.mxu0 0.0
    %206 = vmatpush1.msra.mxu0 0.0
    %207 = vmatprep.subr.mxu0 0.0
    %208 = vmatpush1.msra.mxu0 0.0
    %209 = vmatprep.subr.mxu0 0.0
    %210 = vmatpush1.msra.mxu0 0.0
    %211 = vmatprep.subr.mxu0 0.0
    %212 = vmatpush1.msra.mxu0 0.0
    %213 = vmatprep.subr.mxu0 0.0
    %214 = vmatpush1.msra.mxu0 0.0
    %215 = vmatprep.subr.mxu0 0.0
    %216 = vmatpush1.msra.mxu0 0.0
    %217 = vmatprep.subr.mxu0 0.0
    %218 = vmatpush1.msra.mxu0 0.0
    %219 = vmatprep.subr.mxu0 0.0
    %220 = vmatpush1.msra.mxu0 0.0
    %221 = vmatprep.subr.mxu0 0.0
    %222 = vmatpush1.msra.mxu0 0.0
    %223 = vmatprep.subr.mxu0 0.0
    %224 = vmatpush1.msra.mxu0 0.0
    %225 = vmatprep.subr.mxu0 0.0
    %226 = vmatpush1.msra.mxu0 0.0
    %227 = vmatprep.subr.mxu0 0.0
    %228 = vmatpush1.msra.mxu0 0.0
    %229 = vmatprep.subr.mxu0 0.0
    %230 = vmatpush1.msra.mxu0 0.0
    %231 = vmatprep.subr.mxu0 0.0
    %232 = vmatpush1.msra.mxu0 0.0
    %233 = vmatprep.subr.mxu0 0.0
    %234 = vmatpush1.msra.mxu0 0.0
    %235 = vmatprep.subr.mxu0 %v179
    %236 = vmatpush1.msra.mxu0 %v178
    %237 = vmatprep.subr.mxu0 0.0
    %238 = vmatpush2.msra.mxu0 0.0
    %239 = vmatprep.subr.mxu0 0.0
    %240 = vmatpush2.msra.mxu0 0.0
    %241 = vmatprep.subr.mxu0 0.0
    %242 = vmatpush2.msra.mxu0 0.0
    %243 = vmatprep.subr.mxu0 0.0
    %244 = vmatpush2.msra.mxu0 0.0
    %245 = vmatprep.subr.mxu0 0.0
    %246 = vmatpush2.msra.mxu0 0.0
    %247 = vmatprep.subr.mxu0 0.0
    %248 = vmatpush2.msra.mxu0 0.0
    %249 = vmatprep.subr.mxu0 0.0
    %250 = vmatpush2.msra.mxu0 0.0
    %251 = vmatprep.subr.mxu0 0.0
    %252 = vmatpush2.msra.mxu0 0.0
    %253 = vmatprep.subr.mxu0 0.0
    %254 = vmatpush2.msra.mxu0 0.0
    %255 = vmatprep.subr.mxu0 0.0
    %256 = vmatpush2.msra.mxu0 0.0
    %257 = vmatprep.subr.mxu0 0.0
    %258 = vmatpush2.msra.mxu0 0.0
    %259 = vmatprep.subr.mxu0 0.0
    %260 = vmatpush2.msra.mxu0 0.0
    %261 = vmatprep.subr.mxu0 0.0
    %262 = vmatpush2.msra.mxu0 0.0
    %263 = vmatprep.subr.mxu0 0.0
    %264 = vmatpush2.msra.mxu0 0.0
    %265 = vmatprep.subr.mxu0 0.0
    %266 = vmatpush2.msra.mxu0 0.0
    %267 = vmatprep.subr.mxu0 0.0
    %268 = vmatpush2.msra.mxu0 0.0
    %269 = vmatprep.mubr.f32.mxu0 0.0
    %270 = vmatmul.mubr.f32.gmra.mxu0 %v194
    %v271 = vpop.f32.mrf.mxu0
    %v272 = vadd.f32 0.0, %v271
    %v273 = vpop.f32.mrf.mxu0
    %v274 = vadd.f32 0.0, %v273
    %275 = vmatprep.mubr.f32.mxu0 0.0
    %276 = vmatmul.mubr.f32.gmra.mxu0 %v197
    %v277 = vpop.f32.mrf.mxu0
    %v278 = vadd.f32 0.0, %v277
    %v279 = vpop.f32.mrf.mxu0
    %v280 = vadd.f32 0.0, %v279
    %281 = vmatprep.mubr.f32.mxu0 0.0
    %282 = vmatmul.mubr.f32.gmra.mxu0 %v200
    %v283 = vpop.f32.mrf.mxu0
    %v284 = vadd.f32 0.0, %v283
    %v285 = vpop.f32.mrf.mxu0
    %v286 = vadd.f32 0.0, %v285
    %287 = vmatprep.mubr.f32.mxu0 0.0
    %288 = vmatmul.mubr.f32.gmra.mxu0 %v203
    %v289 = vpop.f32.mrf.mxu0
    %v290 = vadd.f32 0.0, %v289
    %v291 = vpop.f32.mrf.mxu0
    %v292 = vadd.f32 0.0, %v291
    %293 = vdwg.mxu0
    %v422 = vcombine.low %v50, %v51
    %v423 = vcombine.low %v52, %v53
    %v425 = vunpack.c.l.s4 1983009808
    %v426 = vunpack.c.0.s8 %v425
    %v427 = vlaneseq
    %v428 = vshrl.u32 %v427, 7
    %v429 = vsub.s32 %v426, %v428
    %v430 = vrot.slane %v422, %v429
    %v432 = vunpack.c.l.s4 1983009808
    %v433 = vunpack.c.0.s8 %v432
    %v434 = vlaneseq
    %v435 = vshrl.u32 %v434, 7
    %v436 = vsub.s32 %v433, %v435
    %v437 = vrot.slane %v423, %v436
    %v438 = vcombine.low %v430, %v437
    %v439 = vcombine.high %v430, %v437
    %v440 = vcombine.low %v54, %v55
    %v441 = vcombine.low %v56, %v57
    %v443 = vunpack.c.l.s4 1983009808
    %v444 = vunpack.c.0.s8 %v443
    %v445 = vlaneseq
    %v446 = vshrl.u32 %v445, 7
    %v447 = vsub.s32 %v444, %v446
    %v448 = vrot.slane %v440, %v447
    %v450 = vunpack.c.l.s4 1983009808
    %v451 = vunpack.c.0.s8 %v450
    %v452 = vlaneseq
    %v453 = vshrl.u32 %v452, 7
    %v454 = vsub.s32 %v451, %v453
    %v455 = vrot.slane %v441, %v454
    %v456 = vcombine.low %v448, %v455
    %v457 = vcombine.high %v448, %v455
    %v458 = vcombine.low %v58, %v59
    %v459 = vcombine.low %v60, %v61
    %v461 = vunpack.c.l.s4 1983009808
    %v462 = vunpack.c.0.s8 %v461
    %v463 = vlaneseq
    %v464 = vshrl.u32 %v463, 7
    %v465 = vsub.s32 %v462, %v464
    %v466 = vrot.slane %v458, %v465
    %v468 = vunpack.c.l.s4 1983009808
    %v469 = vunpack.c.0.s8 %v468
    %v470 = vlaneseq
    %v471 = vshrl.u32 %v470, 7
    %v472 = vsub.s32 %v469, %v471
    %v473 = vrot.slane %v459, %v472
    %v474 = vcombine.low %v466, %v473
    %v475 = vcombine.high %v466, %v473
    %v476 = vcombine.low %v62, %v63
    %v477 = vcombine.low %v64, %v65
    %v479 = vunpack.c.l.s4 1983009808
    %v480 = vunpack.c.0.s8 %v479
    %v481 = vlaneseq
    %v482 = vshrl.u32 %v481, 7
    %v483 = vsub.s32 %v480, %v482
    %v484 = vrot.slane %v476, %v483
    %v486 = vunpack.c.l.s4 1983009808
    %v487 = vunpack.c.0.s8 %v486
    %v488 = vlaneseq
    %v489 = vshrl.u32 %v488, 7
    %v490 = vsub.s32 %v487, %v489
    %v491 = vrot.slane %v477, %v490
    %v492 = vcombine.low %v484, %v491
    %v493 = vcombine.high %v484, %v491
    %v494 = vcombine.low %v66, %v67
    %v495 = vcombine.low %v68, %v69
    %v497 = vunpack.c.l.s4 1983009808
    %v498 = vunpack.c.0.s8 %v497
    %v499 = vlaneseq
    %v500 = vshrl.u32 %v499, 7
    %v501 = vsub.s32 %v498, %v500
    %v502 = vrot.slane %v494, %v501
    %v504 = vunpack.c.l.s4 1983009808
    %v505 = vunpack.c.0.s8 %v504
    %v506 = vlaneseq
    %v507 = vshrl.u32 %v506, 7
    %v508 = vsub.s32 %v505, %v507
    %v509 = vrot.slane %v495, %v508
    %v510 = vcombine.low %v502, %v509
    %v511 = vcombine.high %v502, %v509
    %v512 = vcombine.low %v70, %v71
    %v513 = vcombine.low %v72, %v73
    %v515 = vunpack.c.l.s4 1983009808
    %v516 = vunpack.c.0.s8 %v515
    %v517 = vlaneseq
    %v518 = vshrl.u32 %v517, 7
    %v519 = vsub.s32 %v516, %v518
    %v520 = vrot.slane %v512, %v519
    %v522 = vunpack.c.l.s4 1983009808
    %v523 = vunpack.c.0.s8 %v522
    %v524 = vlaneseq
    %v525 = vshrl.u32 %v524, 7
    %v526 = vsub.s32 %v523, %v525
    %v527 = vrot.slane %v513, %v526
    %v528 = vcombine.low %v520, %v527
    %v529 = vcombine.high %v520, %v527
    %v530 = vcombine.low %v74, %v75
    %v531 = vcombine.low %v76, %v77
    %v533 = vunpack.c.l.s4 1983009808
    %v534 = vunpack.c.0.s8 %v533
    %v535 = vlaneseq
    %v536 = vshrl.u32 %v535, 7
    %v537 = vsub.s32 %v534, %v536
    %v538 = vrot.slane %v530, %v537
    %v540 = vunpack.c.l.s4 1983009808
    %v541 = vunpack.c.0.s8 %v540
    %v542 = vlaneseq
    %v543 = vshrl.u32 %v542, 7
    %v544 = vsub.s32 %v541, %v543
    %v545 = vrot.slane %v531, %v544
    %v546 = vcombine.low %v538, %v545
    %v547 = vcombine.high %v538, %v545
    %v548 = vcombine.low %v78, %v79
    %v549 = vcombine.low %v80, %v81
    %v551 = vunpack.c.l.s4 1983009808
    %v552 = vunpack.c.0.s8 %v551
    %v553 = vlaneseq
    %v554 = vshrl.u32 %v553, 7
    %v555 = vsub.s32 %v552, %v554
    %v556 = vrot.slane %v548, %v555
    %v558 = vunpack.c.l.s4 1983009808
    %v559 = vunpack.c.0.s8 %v558
    %v560 = vlaneseq
    %v561 = vshrl.u32 %v560, 7
    %v562 = vsub.s32 %v559, %v561
    %v563 = vrot.slane %v549, %v562
    %v564 = vcombine.low %v556, %v563
    %v565 = vcombine.high %v556, %v563
    %v566 = vcombine.low %v82, %v83
    %v567 = vcombine.low %v84, %v85
    %v569 = vunpack.c.l.s4 1983009808
    %v570 = vunpack.c.0.s8 %v569
    %v571 = vlaneseq
    %v572 = vshrl.u32 %v571, 7
    %v573 = vsub.s32 %v570, %v572
    %v574 = vrot.slane %v566, %v573
    %v576 = vunpack.c.l.s4 1983009808
    %v577 = vunpack.c.0.s8 %v576
    %v578 = vlaneseq
    %v579 = vshrl.u32 %v578, 7
    %v580 = vsub.s32 %v577, %v579
    %v581 = vrot.slane %v567, %v580
    %v582 = vcombine.low %v574, %v581
    %v583 = vcombine.high %v574, %v581
    %v584 = vcombine.low %v86, %v87
    %v585 = vcombine.low %v88, %v89
    %v587 = vunpack.c.l.s4 1983009808
    %v588 = vunpack.c.0.s8 %v587
    %v589 = vlaneseq
    %v590 = vshrl.u32 %v589, 7
    %v591 = vsub.s32 %v588, %v590
    %v592 = vrot.slane %v584, %v591
    %v594 = vunpack.c.l.s4 1983009808
    %v595 = vunpack.c.0.s8 %v594
    %v596 = vlaneseq
    %v597 = vshrl.u32 %v596, 7
    %v598 = vsub.s32 %v595, %v597
    %v599 = vrot.slane %v585, %v598
    %v600 = vcombine.low %v592, %v599
    %v601 = vcombine.high %v592, %v599
    %v602 = vcombine.low %v90, %v91
    %v603 = vcombine.low %v92, %v93
    %v605 = vunpack.c.l.s4 1983009808
    %v606 = vunpack.c.0.s8 %v605
    %v607 = vlaneseq
    %v608 = vshrl.u32 %v607, 7
    %v609 = vsub.s32 %v606, %v608
    %v610 = vrot.slane %v602, %v609
    %v612 = vunpack.c.l.s4 1983009808
    %v613 = vunpack.c.0.s8 %v612
    %v614 = vlaneseq
    %v615 = vshrl.u32 %v614, 7
    %v616 = vsub.s32 %v613, %v615
    %v617 = vrot.slane %v603, %v616
    %v618 = vcombine.low %v610, %v617
    %v619 = vcombine.high %v610, %v617
    %v620 = vcombine.low %v94, %v95
    %v621 = vcombine.low %v96, %v97
    %v623 = vunpack.c.l.s4 1983009808
    %v624 = vunpack.c.0.s8 %v623
    %v625 = vlaneseq
    %v626 = vshrl.u32 %v625, 7
    %v627 = vsub.s32 %v624, %v626
    %v628 = vrot.slane %v620, %v627
    %v630 = vunpack.c.l.s4 1983009808
    %v631 = vunpack.c.0.s8 %v630
    %v632 = vlaneseq
    %v633 = vshrl.u32 %v632, 7
    %v634 = vsub.s32 %v631, %v633
    %v635 = vrot.slane %v621, %v634
    %v636 = vcombine.low %v628, %v635
    %v637 = vcombine.high %v628, %v635
    %v638 = vcombine.low %v98, %v99
    %v639 = vcombine.low %v100, %v101
    %v641 = vunpack.c.l.s4 1983009808
    %v642 = vunpack.c.0.s8 %v641
    %v643 = vlaneseq
    %v644 = vshrl.u32 %v643, 7
    %v645 = vsub.s32 %v642, %v644
    %v646 = vrot.slane %v638, %v645
    %v648 = vunpack.c.l.s4 1983009808
    %v649 = vunpack.c.0.s8 %v648
    %v650 = vlaneseq
    %v651 = vshrl.u32 %v650, 7
    %v652 = vsub.s32 %v649, %v651
    %v653 = vrot.slane %v639, %v652
    %v654 = vcombine.low %v646, %v653
    %v655 = vcombine.high %v646, %v653
    %v656 = vcombine.low %v102, %v103
    %v657 = vcombine.low %v104, %v105
    %v659 = vunpack.c.l.s4 1983009808
    %v660 = vunpack.c.0.s8 %v659
    %v661 = vlaneseq
    %v662 = vshrl.u32 %v661, 7
    %v663 = vsub.s32 %v660, %v662
    %v664 = vrot.slane %v656, %v663
    %v666 = vunpack.c.l.s4 1983009808
    %v667 = vunpack.c.0.s8 %v666
    %v668 = vlaneseq
    %v669 = vshrl.u32 %v668, 7
    %v670 = vsub.s32 %v667, %v669
    %v671 = vrot.slane %v657, %v670
    %v672 = vcombine.low %v664, %v671
    %v673 = vcombine.high %v664, %v671
    %v674 = vcombine.low %v106, %v107
    %v675 = vcombine.low %v108, %v109
    %v677 = vunpack.c.l.s4 1983009808
    %v678 = vunpack.c.0.s8 %v677
    %v679 = vlaneseq
    %v680 = vshrl.u32 %v679, 7
    %v681 = vsub.s32 %v678, %v680
    %v682 = vrot.slane %v674, %v681
    %v684 = vunpack.c.l.s4 1983009808
    %v685 = vunpack.c.0.s8 %v684
    %v686 = vlaneseq
    %v687 = vshrl.u32 %v686, 7
    %v688 = vsub.s32 %v685, %v687
    %v689 = vrot.slane %v675, %v688
    %v690 = vcombine.low %v682, %v689
    %v691 = vcombine.high %v682, %v689
    %v692 = vcombine.low %v110, %v111
    %v693 = vcombine.low %v112, %v113
    %v695 = vunpack.c.l.s4 1983009808
    %v696 = vunpack.c.0.s8 %v695
    %v697 = vlaneseq
    %v698 = vshrl.u32 %v697, 7
    %v699 = vsub.s32 %v696, %v698
    %v700 = vrot.slane %v692, %v699
    %v702 = vunpack.c.l.s4 1983009808
    %v703 = vunpack.c.0.s8 %v702
    %v704 = vlaneseq
    %v705 = vshrl.u32 %v704, 7
    %v706 = vsub.s32 %v703, %v705
    %v707 = vrot.slane %v693, %v706
    %v708 = vcombine.low %v700, %v707
    %v709 = vcombine.high %v700, %v707
    %v710 = vcombine.low %v114, %v115
    %v711 = vcombine.low %v116, %v117
    %v713 = vunpack.c.l.s4 1983009808
    %v714 = vunpack.c.0.s8 %v713
    %v715 = vlaneseq
    %v716 = vshrl.u32 %v715, 7
    %v717 = vsub.s32 %v714, %v716
    %v718 = vrot.slane %v710, %v717
    %v720 = vunpack.c.l.s4 1983009808
    %v721 = vunpack.c.0.s8 %v720
    %v722 = vlaneseq
    %v723 = vshrl.u32 %v722, 7
    %v724 = vsub.s32 %v721, %v723
    %v725 = vrot.slane %v711, %v724
    %v726 = vcombine.low %v718, %v725
    %v727 = vcombine.high %v718, %v725
    %v728 = vcombine.low %v118, %v119
    %v729 = vcombine.low %v120, %v121
    %v731 = vunpack.c.l.s4 1983009808
    %v732 = vunpack.c.0.s8 %v731
    %v733 = vlaneseq
    %v734 = vshrl.u32 %v733, 7
    %v735 = vsub.s32 %v732, %v734
    %v736 = vrot.slane %v728, %v735
    %v738 = vunpack.c.l.s4 1983009808
    %v739 = vunpack.c.0.s8 %v738
    %v740 = vlaneseq
    %v741 = vshrl.u32 %v740, 7
    %v742 = vsub.s32 %v739, %v741
    %v743 = vrot.slane %v729, %v742
    %v744 = vcombine.low %v736, %v743
    %v745 = vcombine.high %v736, %v743
    %v746 = vcombine.low %v122, %v123
    %v747 = vcombine.low %v124, %v125
    %v749 = vunpack.c.l.s4 1983009808
    %v750 = vunpack.c.0.s8 %v749
    %v751 = vlaneseq
    %v752 = vshrl.u32 %v751, 7
    %v753 = vsub.s32 %v750, %v752
    %v754 = vrot.slane %v746, %v753
    %v756 = vunpack.c.l.s4 1983009808
    %v757 = vunpack.c.0.s8 %v756
    %v758 = vlaneseq
    %v759 = vshrl.u32 %v758, 7
    %v760 = vsub.s32 %v757, %v759
    %v761 = vrot.slane %v747, %v760
    %v762 = vcombine.low %v754, %v761
    %v763 = vcombine.high %v754, %v761
    %v764 = vcombine.low %v126, %v127
    %v765 = vcombine.low %v128, %v129
    %v767 = vunpack.c.l.s4 1983009808
    %v768 = vunpack.c.0.s8 %v767
    %v769 = vlaneseq
    %v770 = vshrl.u32 %v769, 7
    %v771 = vsub.s32 %v768, %v770
    %v772 = vrot.slane %v764, %v771
    %v774 = vunpack.c.l.s4 1983009808
    %v775 = vunpack.c.0.s8 %v774
    %v776 = vlaneseq
    %v777 = vshrl.u32 %v776, 7
    %v778 = vsub.s32 %v775, %v777
    %v779 = vrot.slane %v765, %v778
    %v780 = vcombine.low %v772, %v779
    %v781 = vcombine.high %v772, %v779
    %v782 = vcombine.low %v130, %v131
    %v783 = vcombine.low %v132, %v133
    %v785 = vunpack.c.l.s4 1983009808
    %v786 = vunpack.c.0.s8 %v785
    %v787 = vlaneseq
    %v788 = vshrl.u32 %v787, 7
    %v789 = vsub.s32 %v786, %v788
    %v790 = vrot.slane %v782, %v789
    %v792 = vunpack.c.l.s4 1983009808
    %v793 = vunpack.c.0.s8 %v792
    %v794 = vlaneseq
    %v795 = vshrl.u32 %v794, 7
    %v796 = vsub.s32 %v793, %v795
    %v797 = vrot.slane %v783, %v796
    %v798 = vcombine.low %v790, %v797
    %v799 = vcombine.high %v790, %v797
    %v800 = vcombine.low %v134, %v135
    %v801 = vcombine.low %v136, %v137
    %v803 = vunpack.c.l.s4 1983009808
    %v804 = vunpack.c.0.s8 %v803
    %v805 = vlaneseq
    %v806 = vshrl.u32 %v805, 7
    %v807 = vsub.s32 %v804, %v806
    %v808 = vrot.slane %v800, %v807
    %v810 = vunpack.c.l.s4 1983009808
    %v811 = vunpack.c.0.s8 %v810
    %v812 = vlaneseq
    %v813 = vshrl.u32 %v812, 7
    %v814 = vsub.s32 %v811, %v813
    %v815 = vrot.slane %v801, %v814
    %v816 = vcombine.low %v808, %v815
    %v817 = vcombine.high %v808, %v815
    %v818 = vcombine.low %v138, %v139
    %v819 = vcombine.low %v140, %v141
    %v821 = vunpack.c.l.s4 1983009808
    %v822 = vunpack.c.0.s8 %v821
    %v823 = vlaneseq
    %v824 = vshrl.u32 %v823, 7
    %v825 = vsub.s32 %v822, %v824
    %v826 = vrot.slane %v818, %v825
    %v828 = vunpack.c.l.s4 1983009808
    %v829 = vunpack.c.0.s8 %v828
    %v830 = vlaneseq
    %v831 = vshrl.u32 %v830, 7
    %v832 = vsub.s32 %v829, %v831
    %v833 = vrot.slane %v819, %v832
    %v834 = vcombine.low %v826, %v833
    %v835 = vcombine.high %v826, %v833
    %v836 = vcombine.low %v142, %v143
    %v837 = vcombine.low %v144, %v145
    %v839 = vunpack.c.l.s4 1983009808
    %v840 = vunpack.c.0.s8 %v839
    %v841 = vlaneseq
    %v842 = vshrl.u32 %v841, 7
    %v843 = vsub.s32 %v840, %v842
    %v844 = vrot.slane %v836, %v843
    %v846 = vunpack.c.l.s4 1983009808
    %v847 = vunpack.c.0.s8 %v846
    %v848 = vlaneseq
    %v849 = vshrl.u32 %v848, 7
    %v850 = vsub.s32 %v847, %v849
    %v851 = vrot.slane %v837, %v850
    %v852 = vcombine.low %v844, %v851
    %v853 = vcombine.high %v844, %v851
    %v854 = vcombine.low %v146, %v147
    %v855 = vcombine.low %v148, %v149
    %v857 = vunpack.c.l.s4 1983009808
    %v858 = vunpack.c.0.s8 %v857
    %v859 = vlaneseq
    %v860 = vshrl.u32 %v859, 7
    %v861 = vsub.s32 %v858, %v860
    %v862 = vrot.slane %v854, %v861
    %v864 = vunpack.c.l.s4 1983009808
    %v865 = vunpack.c.0.s8 %v864
    %v866 = vlaneseq
    %v867 = vshrl.u32 %v866, 7
    %v868 = vsub.s32 %v865, %v867
    %v869 = vrot.slane %v855, %v868
    %v870 = vcombine.low %v862, %v869
    %v871 = vcombine.high %v862, %v869
    %v872 = vcombine.low %v150, %v151
    %v873 = vcombine.low %v152, %v153
    %v875 = vunpack.c.l.s4 1983009808
    %v876 = vunpack.c.0.s8 %v875
    %v877 = vlaneseq
    %v878 = vshrl.u32 %v877, 7
    %v879 = vsub.s32 %v876, %v878
    %v880 = vrot.slane %v872, %v879
    %v882 = vunpack.c.l.s4 1983009808
    %v883 = vunpack.c.0.s8 %v882
    %v884 = vlaneseq
    %v885 = vshrl.u32 %v884, 7
    %v886 = vsub.s32 %v883, %v885
    %v887 = vrot.slane %v873, %v886
    %v888 = vcombine.low %v880, %v887
    %v889 = vcombine.high %v880, %v887
    %v890 = vcombine.low %v154, %v155
    %v891 = vcombine.low %v156, %v157
    %v893 = vunpack.c.l.s4 1983009808
    %v894 = vunpack.c.0.s8 %v893
    %v895 = vlaneseq
    %v896 = vshrl.u32 %v895, 7
    %v897 = vsub.s32 %v894, %v896
    %v898 = vrot.slane %v890, %v897
    %v900 = vunpack.c.l.s4 1983009808
    %v901 = vunpack.c.0.s8 %v900
    %v902 = vlaneseq
    %v903 = vshrl.u32 %v902, 7
    %v904 = vsub.s32 %v901, %v903
    %v905 = vrot.slane %v891, %v904
    %v906 = vcombine.low %v898, %v905
    %v907 = vcombine.high %v898, %v905
    %v908 = vcombine.low %v158, %v159
    %v909 = vcombine.low %v160, %v161
    %v911 = vunpack.c.l.s4 1983009808
    %v912 = vunpack.c.0.s8 %v911
    %v913 = vlaneseq
    %v914 = vshrl.u32 %v913, 7
    %v915 = vsub.s32 %v912, %v914
    %v916 = vrot.slane %v908, %v915
    %v918 = vunpack.c.l.s4 1983009808
    %v919 = vunpack.c.0.s8 %v918
    %v920 = vlaneseq
    %v921 = vshrl.u32 %v920, 7
    %v922 = vsub.s32 %v919, %v921
    %v923 = vrot.slane %v909, %v922
    %v924 = vcombine.low %v916, %v923
    %v925 = vcombine.high %v916, %v923
    %v926 = vcombine.low %v162, %v163
    %v927 = vcombine.low %v164, %v165
    %v929 = vunpack.c.l.s4 1983009808
    %v930 = vunpack.c.0.s8 %v929
    %v931 = vlaneseq
    %v932 = vshrl.u32 %v931, 7
    %v933 = vsub.s32 %v930, %v932
    %v934 = vrot.slane %v926, %v933
    %v936 = vunpack.c.l.s4 1983009808
    %v937 = vunpack.c.0.s8 %v936
    %v938 = vlaneseq
    %v939 = vshrl.u32 %v938, 7
    %v940 = vsub.s32 %v937, %v939
    %v941 = vrot.slane %v927, %v940
    %v942 = vcombine.low %v934, %v941
    %v943 = vcombine.high %v934, %v941
    %v944 = vcombine.low %v166, %v167
    %v945 = vcombine.low %v168, %v169
    %v947 = vunpack.c.l.s4 1983009808
    %v948 = vunpack.c.0.s8 %v947
    %v949 = vlaneseq
    %v950 = vshrl.u32 %v949, 7
    %v951 = vsub.s32 %v948, %v950
    %v952 = vrot.slane %v944, %v951
    %v954 = vunpack.c.l.s4 1983009808
    %v955 = vunpack.c.0.s8 %v954
    %v956 = vlaneseq
    %v957 = vshrl.u32 %v956, 7
    %v958 = vsub.s32 %v955, %v957
    %v959 = vrot.slane %v945, %v958
    %v960 = vcombine.low %v952, %v959
    %v961 = vcombine.high %v952, %v959
    %v962 = vcombine.low %v170, %v171
    %v963 = vcombine.low %v172, %v173
    %v965 = vunpack.c.l.s4 1983009808
    %v966 = vunpack.c.0.s8 %v965
    %v967 = vlaneseq
    %v968 = vshrl.u32 %v967, 7
    %v969 = vsub.s32 %v966, %v968
    %v970 = vrot.slane %v962, %v969
    %v972 = vunpack.c.l.s4 1983009808
    %v973 = vunpack.c.0.s8 %v972
    %v974 = vlaneseq
    %v975 = vshrl.u32 %v974, 7
    %v976 = vsub.s32 %v973, %v975
    %v977 = vrot.slane %v963, %v976
    %v978 = vcombine.low %v970, %v977
    %v979 = vcombine.high %v970, %v977
    %v980 = vcombine.low %v174, %v175
    %v981 = vcombine.low %v176, %v177
    %v983 = vunpack.c.l.s4 1983009808
    %v984 = vunpack.c.0.s8 %v983
    %v985 = vlaneseq
    %v986 = vshrl.u32 %v985, 7
    %v987 = vsub.s32 %v984, %v986
    %v988 = vrot.slane %v980, %v987
    %v990 = vunpack.c.l.s4 1983009808
    %v991 = vunpack.c.0.s8 %v990
    %v992 = vlaneseq
    %v993 = vshrl.u32 %v992, 7
    %v994 = vsub.s32 %v991, %v993
    %v995 = vrot.slane %v981, %v994
    %v996 = vcombine.low %v988, %v995
    %v997 = vcombine.high %v988, %v995
    %1062 = vmatprep.subr.mxu0 %v709
    %1063 = vmatpush1.xpose.msra.mxu0 %v708
    %1064 = vmatprep.subr.mxu0 %v691
    %1065 = vmatpush1.xpose.msra.mxu0 %v690
    %1066 = vmatprep.subr.mxu0 %v673
    %1067 = vmatpush1.xpose.msra.mxu0 %v672
    %1068 = vmatprep.subr.mxu0 %v655
    %1069 = vmatpush1.xpose.msra.mxu0 %v654
    %1070 = vmatprep.subr.mxu0 %v637
    %1071 = vmatpush1.xpose.msra.mxu0 %v636
    %1072 = vmatprep.subr.mxu0 %v619
    %1073 = vmatpush1.xpose.msra.mxu0 %v618
    %1074 = vmatprep.subr.mxu0 %v601
    %1075 = vmatpush1.xpose.msra.mxu0 %v600
    %1076 = vmatprep.subr.mxu0 %v583
    %1077 = vmatpush1.xpose.msra.mxu0 %v582
    %1078 = vmatprep.subr.mxu0 %v565
    %1079 = vmatpush1.xpose.msra.mxu0 %v564
    %1080 = vmatprep.subr.mxu0 %v547
    %1081 = vmatpush1.xpose.msra.mxu0 %v546
    %1082 = vmatprep.subr.mxu0 %v529
    %1083 = vmatpush1.xpose.msra.mxu0 %v528
    %1084 = vmatprep.subr.mxu0 %v511
    %1085 = vmatpush1.xpose.msra.mxu0 %v510
    %1086 = vmatprep.subr.mxu0 %v493
    %1087 = vmatpush1.xpose.msra.mxu0 %v492
    %1088 = vmatprep.subr.mxu0 %v475
    %1089 = vmatpush1.xpose.msra.mxu0 %v474
    %1090 = vmatprep.subr.mxu0 %v457
    %1091 = vmatpush1.xpose.msra.mxu0 %v456
    %1092 = vmatprep.subr.mxu0 %v439
    %1093 = vmatpush1.xpose.msra.mxu0 %v438
    %1094 = vmatprep.subr.mxu0 %v997
    %1095 = vmatpush2.xpose.msra.mxu0 %v996
    %1096 = vmatprep.subr.mxu0 %v979
    %1097 = vmatpush2.xpose.msra.mxu0 %v978
    %1098 = vmatprep.subr.mxu0 %v961
    %1099 = vmatpush2.xpose.msra.mxu0 %v960
    %1100 = vmatprep.subr.mxu0 %v943
    %1101 = vmatpush2.xpose.msra.mxu0 %v942
    %1102 = vmatprep.subr.mxu0 %v925
    %1103 = vmatpush2.xpose.msra.mxu0 %v924
    %1104 = vmatprep.subr.mxu0 %v907
    %1105 = vmatpush2.xpose.msra.mxu0 %v906
    %1106 = vmatprep.subr.mxu0 %v889
    %1107 = vmatpush2.xpose.msra.mxu0 %v888
    %1108 = vmatprep.subr.mxu0 %v871
    %1109 = vmatpush2.xpose.msra.mxu0 %v870
    %1110 = vmatprep.subr.mxu0 %v853
    %1111 = vmatpush2.xpose.msra.mxu0 %v852
    %1112 = vmatprep.subr.mxu0 %v835
    %1113 = vmatpush2.xpose.msra.mxu0 %v834
    %1114 = vmatprep.subr.mxu0 %v817
    %1115 = vmatpush2.xpose.msra.mxu0 %v816
    %1116 = vmatprep.subr.mxu0 %v799
    %1117 = vmatpush2.xpose.msra.mxu0 %v798
    %1118 = vmatprep.subr.mxu0 %v781
    %1119 = vmatpush2.xpose.msra.mxu0 %v780
    %1120 = vmatprep.subr.mxu0 %v763
    %1121 = vmatpush2.xpose.msra.mxu0 %v762
    %1122 = vmatprep.subr.mxu0 %v745
    %1123 = vmatpush2.xpose.msra.mxu0 %v744
    %1124 = vmatprep.subr.mxu0 %v727
    %1125 = vmatpush2.xpose.msra.mxu0 %v726
    %1126 = vmatprep.mubr.f32.mxu0 %v181
    %1127 = vmatmul.mubr.f32.gmra.mxu0 %v180
    %v1128 = vpop.f32.mrf.mxu0
    %v1129 = vadd.f32 %v272, %v1128
    %v1130 = vpop.f32.mrf.mxu0
    %v1131 = vadd.f32 %v274, %v1130
    %1132 = vmatprep.mubr.f32.mxu0 %v183
    %1133 = vmatmul.mubr.f32.gmra.mxu0 %v182
    %v1134 = vpop.f32.mrf.mxu0
    %v1135 = vadd.f32 %v278, %v1134
    %v1136 = vpop.f32.mrf.mxu0
    %v1137 = vadd.f32 %v280, %v1136
    %1138 = vmatprep.mubr.f32.mxu0 %v185
    %1139 = vmatmul.mubr.f32.gmra.mxu0 %v184
    %v1140 = vpop.f32.mrf.mxu0
    %v1141 = vadd.f32 %v284, %v1140
    %v1142 = vpop.f32.mrf.mxu0
    %v1143 = vadd.f32 %v286, %v1142
    %1144 = vmatprep.mubr.f32.mxu0 %v187
    %1145 = vmatmul.mubr.f32.gmra.mxu0 %v186
    %v1146 = vpop.f32.mrf.mxu0
    %v1147 = vadd.f32 %v290, %v1146
    %v1148 = vpop.f32.mrf.mxu0
    %v1149 = vadd.f32 %v292, %v1148
    %1150 = vdwg.mxu0
    %v1151 = vld [vmem:[%s4] sm:$0xff]
    %v1152 = vld [vmem:[%s4 + $0x8] sm:$0xff]
    %v1153 = vld [vmem:[%s4 + $0x10] sm:$0xff]
    %v1154 = vld [vmem:[%s4 + $0x18] sm:$0xff]
    %1156 = vset.pattern.permute.xlu0 0
    %1157 = vperm.xlu0 %1156, %v1151
    %v1158 = vpop.permute.xlu0 %1157
    %1161 = vset.pattern.permute.xlu0 0
    %1162 = vperm.xlu0 %1161, %v1152
    %v1163 = vpop.permute.xlu0 %1162
    %1166 = vset.pattern.permute.xlu0 0
    %1167 = vperm.xlu0 %1166, %v1153
    %v1168 = vpop.permute.xlu0 %1167
    %1171 = vset.pattern.permute.xlu0 0
    %1172 = vperm.xlu0 %1171, %v1154
    %v1173 = vpop.permute.xlu0 %1172
    %v1175 = vadd.f32 %v1129, %v1158
    %v1176 = vadd.f32 %v1131, %v1158
    %v1177 = vadd.f32 %v1135, %v1163
    %v1178 = vadd.f32 %v1137, %v1163
    %v1179 = vadd.f32 %v1141, %v1168
    %v1180 = vadd.f32 %v1143, %v1168
    %v1181 = vadd.f32 %v1147, %v1173
    %v1182 = vadd.f32 %v1149, %v1173
    %vm1183 = vcmp.gt.f32.partialorder %v1175, 0.0
    %vm1184 = vcmp.gt.f32.partialorder %v1176, 0.0
    %vm1185 = vcmp.gt.f32.partialorder %v1177, 0.0
    %vm1186 = vcmp.gt.f32.partialorder %v1178, 0.0
    %vm1187 = vcmp.gt.f32.partialorder %v1179, 0.0
    %vm1188 = vcmp.gt.f32.partialorder %v1180, 0.0
    %vm1189 = vcmp.gt.f32.partialorder %v1181, 0.0
    %vm1190 = vcmp.gt.f32.partialorder %v1182, 0.0
    %s1191 = sld [smem:[#allocation3]]
    %v1192 = vstv %s1191
    %v1193 = vmul.f32 %v1192, %v1175
    %v1194 = vmul.f32 %v1192, %v1176
    %v1195 = vmul.f32 %v1192, %v1177
    %v1196 = vmul.f32 %v1192, %v1178
    %v1197 = vmul.f32 %v1192, %v1179
    %v1198 = vmul.f32 %v1192, %v1180
    %v1199 = vmul.f32 %v1192, %v1181
    %v1200 = vmul.f32 %v1192, %v1182
    %v1201 = vsel %vm1183, %v1175, %v1193
    %v1202 = vsel %vm1184, %v1176, %v1194
    %v1203 = vsel %vm1185, %v1177, %v1195
    %v1204 = vsel %vm1186, %v1178, %v1196
    %v1205 = vsel %vm1187, %v1179, %v1197
    %v1206 = vsel %vm1188, %v1180, %v1198
    %v1207 = vsel %vm1189, %v1181, %v1199
    %v1208 = vsel %vm1190, %v1182, %v1200
    %v1209 = vld [vmem:[%s6] sm:$0xf]
    %v1210 = vld [vmem:[%s7] sm:$0xf]
    %1212 = vset.pattern.permute.xlu0 0
    %1213 = vperm.xlu0 %1212, %v1210
    %v1214 = vpop.permute.xlu0 %1213
    %vm1216 = vcmask 261120
    %v1218 = vsel %vm1216, %v1209, 0
    %1220 = vmatprep.subr.mxu0 0.0
    %1221 = vmatpush1.msra.mxu0 0.0
    %1222 = vmatprep.subr.mxu0 0.0
    %1223 = vmatpush1.msra.mxu0 0.0
    %1224 = vmatprep.subr.mxu0 0.0
    %1225 = vmatpush1.msra.mxu0 0.0
    %1226 = vmatprep.subr.mxu0 0.0
    %1227 = vmatpush1.msra.mxu0 0.0
    %1228 = vmatprep.subr.mxu0 0.0
    %1229 = vmatpush1.msra.mxu0 0.0
    %1230 = vmatprep.subr.mxu0 0.0
    %1231 = vmatpush1.msra.mxu0 0.0
    %1232 = vmatprep.subr.mxu0 0.0
    %1233 = vmatpush1.msra.mxu0 0.0
    %1234 = vmatprep.subr.mxu0 0.0
    %1235 = vmatpush1.msra.mxu0 0.0
    %1236 = vmatprep.subr.mxu0 0.0
    %1237 = vmatpush1.msra.mxu0 0.0
    %1238 = vmatprep.subr.mxu0 0.0
    %1239 = vmatpush1.msra.mxu0 0.0
    %1240 = vmatprep.subr.mxu0 0.0
    %1241 = vmatpush1.msra.mxu0 0.0
    %1242 = vmatprep.subr.mxu0 0.0
    %1243 = vmatpush1.msra.mxu0 0.0
    %1244 = vmatprep.subr.mxu0 %v1208
    %1245 = vmatpush1.msra.mxu0 %v1207
    %1246 = vmatprep.subr.mxu0 %v1206
    %1247 = vmatpush1.msra.mxu0 %v1205
    %1248 = vmatprep.subr.mxu0 %v1204
    %1249 = vmatpush1.msra.mxu0 %v1203
    %1250 = vmatprep.subr.mxu0 %v1202
    %1251 = vmatpush1.msra.mxu0 %v1201
    %1252 = vmatprep.subr.mxu0 0.0
    %1253 = vmatpush2.msra.mxu0 0.0
    %1254 = vmatprep.subr.mxu0 0.0
    %1255 = vmatpush2.msra.mxu0 0.0
    %1256 = vmatprep.subr.mxu0 0.0
    %1257 = vmatpush2.msra.mxu0 0.0
    %1258 = vmatprep.subr.mxu0 0.0
    %1259 = vmatpush2.msra.mxu0 0.0
    %1260 = vmatprep.subr.mxu0 0.0
    %1261 = vmatpush2.msra.mxu0 0.0
    %1262 = vmatprep.subr.mxu0 0.0
    %1263 = vmatpush2.msra.mxu0 0.0
    %1264 = vmatprep.subr.mxu0 0.0
    %1265 = vmatpush2.msra.mxu0 0.0
    %1266 = vmatprep.subr.mxu0 0.0
    %1267 = vmatpush2.msra.mxu0 0.0
    %1268 = vmatprep.subr.mxu0 0.0
    %1269 = vmatpush2.msra.mxu0 0.0
    %1270 = vmatprep.subr.mxu0 0.0
    %1271 = vmatpush2.msra.mxu0 0.0
    %1272 = vmatprep.subr.mxu0 0.0
    %1273 = vmatpush2.msra.mxu0 0.0
    %1274 = vmatprep.subr.mxu0 0.0
    %1275 = vmatpush2.msra.mxu0 0.0
    %1276 = vmatprep.subr.mxu0 0.0
    %1277 = vmatpush2.msra.mxu0 0.0
    %1278 = vmatprep.subr.mxu0 0.0
    %1279 = vmatpush2.msra.mxu0 0.0
    %1280 = vmatprep.subr.mxu0 0.0
    %1281 = vmatpush2.msra.mxu0 0.0
    %1282 = vmatprep.subr.mxu0 0.0
    %1283 = vmatpush2.msra.mxu0 0.0
    %1284 = vmatprep.mubr.f32.mxu0 0.0
    %1285 = vmatmul.mubr.f32.gmra.mxu0 %v1218
    %v1286 = vpop.f32.mrf.mxu0
    %v1287 = vadd.f32 %v1214, %v1286
    %v1288 = vpop.f32.mrf.mxu0
    %v1289 = vadd.f32 %v1214, %v1288
    %1290 = vdwg.mxu0
    %vm1291 = vcmp.gt.f32.partialorder %v1287, 0.0
    %vm1292 = vcmp.gt.f32.partialorder %v1289, 0.0
    %s1293 = sld [smem:[#allocation3 + $0x1]]
    %v1294 = vstv %s1293
    %v1295 = vmul.f32 %v1294, %v1287
    %v1296 = vmul.f32 %v1294, %v1289
    %v1297 = vsel %vm1291, %v1287, %v1295
    %v1298 = vsel %vm1292, %v1289, %v1296
    %v1299 = vld [vmem:[%s8] sm:$0xf]
    %1301 = vset.pattern.permute.xlu0 0
    %1302 = vperm.xlu0 %1301, %v1299
    %v1303 = vpop.permute.xlu0 %1302
    %v1305 = vmul.f32 %v1297, %v1303
    %v1306 = vmul.f32 %v1298, %v1303
    %vm1307 = vcmask 1043456
    %v1308 = vsel %vm1307, %v1305, 0.0
    %v1309 = vrot.slane %v1308, 4
    %v1310 = vadd.f32 %v1308, %v1309
    %v1311 = vrot.slane %v1310, 2
    %v1312 = vadd.f32 %v1310, %v1311
    %v1313 = vrot.slane %v1312, 1
    %v1314 = vadd.f32 %v1312, %v1313
    %v1315 = vsel %vm1307, %v1306, 0.0
    %v1316 = vrot.slane %v1315, 4
    %v1317 = vadd.f32 %v1315, %v1316
    %v1318 = vrot.slane %v1317, 2
    %v1319 = vadd.f32 %v1317, %v1318
    %v1320 = vrot.slane %v1319, 1
    %v1321 = vadd.f32 %v1319, %v1320
    %s1322 = sld [smem:[#allocation2]]
    %v1323 = vstv %s1322
    %v1324 = vadd.f32 %v1314, %v1323
    %v1325 = vadd.f32 %v1321, %v1323
    %v1328 = vcombine.low %v1324, %v1325
    %v1330 = vunpack.c.l.s4 1966171168
    %v1331 = vunpack.c.0.s8 %v1330
    %v1332 = vlaneseq
    %v1333 = vshrl.u32 %v1332, 7
    %v1334 = vsub.s32 %v1331, %v1333
    %v1335 = vrot.slane %v1328, %v1334
    %v1337 = vunpack.c.l.s4 1966171168
    %v1338 = vunpack.c.0.s8 %v1337
    %v1339 = vlaneseq
    %v1340 = vshrl.u32 %v1339, 7
    %v1341 = vsub.s32 %v1338, %v1340
    %v1342 = vrot.slane %v1335, %v1341
    %v1344 = vlaneseq
    %vm1345 = vcmp.ge.s32.totalorder %v1344, 0
    %vm1346 = vcmp.lt.s32.totalorder %v1344, 256
    %vm1347 = vmand %vm1345, %vm1346
    %1348 = vst.msk [vmem:[#allocation6] sm:$0x3] %vm1347, %v1342
    // Predicated region
    $region46: #{tpu_custom_call.1} parent=1 // pred_check
      _
    $region47: #{tpu_custom_call.1} parent=1 // pred_check_branch
      %1350 = sbr.rel (0) target = $region49
    $region48: #{tpu_custom_call.1} parent=1 // pred_region
      %s1352 = ssub.s32 32, 32
      %1353 = vsyncadd [#allocation4], %s1352
      %s1355 = sshll.u32 [#allocation6], 4
      %s1356 = int_to_ptr.vmem [resolvable:$true] %s1355
      %1358 = dma.vmem_to_hbm [thread:$0]  %s1356, 32, %s10, [#allocation4]
    $region49: #{tpu_custom_call.1} parent=1 // pred_fallthru
      _
    // Predicated region
    $region50: #{tpu_custom_call.1} parent=1 // pred_check
      _
    $region51: #{tpu_custom_call.1} parent=1 // pred_check_branch
      %1360 = sbr.rel (0) target = $region53
    $region52: #{tpu_custom_call.1} parent=1 // pred_region
      %1361 = dma.done [#allocation4], 32
    $region53: #{tpu_custom_call.1} parent=1 // pred_fallthru
      _
    %1362 = vsyncpa [#allocation4], 1
    %1363 = vsyncpa [#allocation5], 1

</llo_original>
